<compile_context>
chip_gen: v5e
topology: v5e:2x2
jax: 0.10.0
libtpu: 0.0.40
codegen_flags: <defaults>
</compile_context>

<pallas_src>
import functools

import jax
import jax.numpy as jnp
from jax import lax
from jax.experimental import pallas as pl
from jax.experimental.pallas import tpu as pltpu


def _choose_tile_rows(n, c, itemsize):
    """Row-tile size: few-MiB working set, >= ~8 grid blocks when n allows."""
    mult = 8 if itemsize >= 4 else 16            # sublane packing multiple
    # Bytes per tile row actually resident in VMEM:
    #   2 inputs x 2 pipeline buffers  +  ~4 f32 tile-sized temporaries.
    per_row = 2 * 2 * c * itemsize + 4 * c * 4
    budget = 8 << 20                             # few-MiB tiles ~ HBM roofline
    tm = budget // max(per_row, 1)
    tm = min(tm, 512)                            # diminishing returns past ~512
    tm = min(tm, pl.cdiv(n, 8))                  # prefer >= 8 pipelined blocks
    tm = max(mult, (tm // mult) * mult)          # sublane multiple, never 0
    if per_row * tm > (40 << 20):
        # TODO(synk): very wide class dims need a 2-D grid over the class axis
        # with a two-pass / online logsumexp; 1-D row tiling would blow VMEM.
        raise NotImplementedError(f"class dim too wide ({c}) for 1-D row tiling")
    return tm


def _kl_soft_kernel(s_ref, t_ref, o_ref, *, inv_t, tile_rows, n_rows):
    pid = pl.program_id(0)

    s = s_ref[...].astype(jnp.float32) * inv_t
    t = t_ref[...].astype(jnp.float32) * inv_t

    # Row-local log-sum-exp pieces along the class (lane) axis.
    s_max = jnp.max(s, axis=-1, keepdims=True)
    t_max = jnp.max(t, axis=-1, keepdims=True)
    s_shift = s - s_max
    t_shift = t - t_max
    s_lse = jnp.log(jnp.sum(jnp.exp(s_shift), axis=-1, keepdims=True))
    t_exp = jnp.exp(t_shift)
    t_sum = jnp.sum(t_exp, axis=-1, keepdims=True)

    # Per-row KL with the row-wise log terms folded out of the lane loop:
    #   KL_row = (1/t_sum) * sum_c t_exp * (t_shift - s_shift)
    #            + (s_lse - log(t_sum))
    inner = jnp.sum(t_exp * (t_shift - s_shift), axis=-1, keepdims=True)
    row_kl = inner * pl.reciprocal(t_sum, approx=False) + (s_lse - jnp.log(t_sum))

    # Zero only the padded rows of the (possibly partial) last tile.  Softmax
    # is row-local, so garbage in padded rows never reaches valid rows; any
    # NaN/Inf they produce lands in their own row_kl and is selected away.
    row_ids = pid * tile_rows + lax.broadcasted_iota(jnp.int32, row_kl.shape, 0)
    row_kl = jnp.where(row_ids < n_rows, row_kl, 0.0)

    # Lane-dense, unmasked store of this tile's partial sum.
    o_ref[...] = jnp.full(o_ref.shape, jnp.sum(row_kl), dtype=jnp.float32)


def kl_soft_loss(s_logits, t_logits, temperature: float = 1.0, *,
                 tile_rows: int | None = None):
    assert s_logits.shape == t_logits.shape and s_logits.ndim == 2
    n, c = s_logits.shape
    itemsize = jnp.dtype(s_logits.dtype).itemsize
    if tile_rows is None:
        tile_rows = _choose_tile_rows(n, c, itemsize)
    tile_rows = int(tile_rows)
    num_tiles = pl.cdiv(n, tile_rows)

    kernel = functools.partial(
        _kl_soft_kernel,
        inv_t=1.0 / float(temperature),
        tile_rows=tile_rows,
        n_rows=n,
    )

    bytes_in = n * c * (itemsize + jnp.dtype(t_logits.dtype).itemsize)
    cost = pl.CostEstimate(
        flops=8 * n * c,
        transcendentals=2 * n * c,
        bytes_accessed=bytes_in + num_tiles * 8 * 128 * 4,
    )

    partials = pl.pallas_call(
        kernel,
        out_shape=jax.ShapeDtypeStruct((num_tiles, 8, 128), jnp.float32),
        grid=(num_tiles,),
        in_specs=[
            pl.BlockSpec((tile_rows, c), lambda i: (i, 0)),
            pl.BlockSpec((tile_rows, c), lambda i: (i, 0)),
        ],
        out_specs=pl.BlockSpec((1, 8, 128), lambda i: (i, 0, 0)),
        compiler_params=pltpu.CompilerParams(
            dimension_semantics=("parallel",),   # v7x: tiles split across TCs
            vmem_limit_bytes=32 << 20,           # ample headroom for ~8 MiB tiles
        ),
        cost_estimate=cost,
    )(s_logits, t_logits)

    # Finalize once: tiny cross-tile reduction + batchmean + T^2 scaling.
    scale = float(temperature) * float(temperature) / n
    return jnp.sum(partials[:, 0, 0]) * scale


def _kl_soft_loss_ref(s_logits, t_logits, temperature: float = 1.0):
    # Pure-JAX reference matching the PyTorch module (f32 math).
    s_logits = s_logits.astype(jnp.float32)
    t_logits = t_logits.astype(jnp.float32)
    s_logp = jax.nn.log_softmax(s_logits / temperature, axis=1)
    t_prob = jax.nn.softmax(t_logits / temperature, axis=1)
    t_logp = jax.nn.log_softmax(t_logits / temperature, axis=1)
    n = s_logits.shape[0]
    return jnp.sum(t_prob * (t_logp - s_logp)) / n * temperature * temperature


if __name__ == "__main__":
    key = jax.random.PRNGKey(0)
    k1, k2, k3, k4, k5, k6 = jax.random.split(key, 6)
    temperature = 2.0

    # Case 1: small lane-dense shape, automatic tile size.
    s1 = jax.random.normal(k1, (16, 128), dtype=jnp.float32)
    t1 = jax.random.normal(k2, (16, 128), dtype=jnp.float32)
    loss1 = jax.block_until_ready(kl_soft_loss(s1, t1, temperature))
    ref1 = _kl_soft_loss_ref(s1, t1, temperature)
    assert jnp.allclose(loss1, ref1, atol=1e-5, rtol=1e-5), (loss1, ref1)

    # Case 2: forced small tile -> 3 pipelined tiles, padded rows on the last
    # tile exercise the per-row masking.
    s2 = jax.random.normal(k3, (20, 256), dtype=jnp.float32)
    t2 = jax.random.normal(k4, (20, 256), dtype=jnp.float32)
    loss2 = jax.block_until_ready(kl_soft_loss(s2, t2, temperature, tile_rows=8))
    ref2 = _kl_soft_loss_ref(s2, t2, temperature)
    assert jnp.allclose(loss2, ref2, atol=1e-5, rtol=1e-5), (loss2, ref2)

    # Case 3: bf16 inputs (recommended for bandwidth) + class dim that is not
    # a multiple of 128 (padded lanes).  Reference uses the same bf16 values
    # upcast to f32, matching the kernel's in-kernel f32 compute.
    s3 = jax.random.normal(k5, (24, 100), dtype=jnp.float32).astype(jnp.bfloat16)
    t3 = jax.random.normal(k6, (24, 100), dtype=jnp.float32).astype(jnp.bfloat16)
    loss3 = jax.block_until_ready(kl_soft_loss(s3, t3, temperature))
    ref3 = _kl_soft_loss_ref(s3, t3, temperature)
    assert jnp.allclose(loss3, ref3, atol=1e-4, rtol=1e-4), (loss3, ref3)

    print("KERNEL_OK")
</pallas_src>

<mosaic_0001>
module attributes {stable_mosaic.version = 11 : i64} {
  func.func @_kl_soft_kernel(%arg0: i32, %arg1: memref<8x128xf32, #tpu.memory_space<vmem>>, %arg2: memref<8x128xf32, #tpu.memory_space<vmem>>, %arg3: memref<1x8x128xf32, #tpu.memory_space<vmem>>) attributes {dimension_semantics = [#tpu.dimension_semantics<parallel>], iteration_bounds = array<i64: 2>, scalar_prefetch = 0 : i64, scratch_operands = 0 : i64, tpu.core_type = #tpu.core_type<tc>, window_params = [{transform_indices = @transform_0, window_bounds = array<i64: 8, 128>}, {transform_indices = @transform_1, window_bounds = array<i64: 8, 128>}, {transform_indices = @transform_2, window_bounds = array<i64: 1, 8, 128>}]} {
    %c0 = arith.constant 0 : index
    %c0_0 = arith.constant 0 : index
    %0 = vector.load %arg1[%c0, %c0_0] : memref<8x128xf32, #tpu.memory_space<vmem>>, vector<8x128xf32>
    %cst = arith.constant 5.000000e-01 : f32
    %1 = vector.broadcast %cst : f32 to vector<8x128xf32>
    %2 = arith.mulf %0, %1 : vector<8x128xf32>
    %c0_1 = arith.constant 0 : index
    %c0_2 = arith.constant 0 : index
    %3 = vector.load %arg2[%c0_1, %c0_2] : memref<8x128xf32, #tpu.memory_space<vmem>>, vector<8x128xf32>
    %cst_3 = arith.constant 5.000000e-01 : f32
    %4 = vector.broadcast %cst_3 : f32 to vector<8x128xf32>
    %5 = arith.mulf %3, %4 : vector<8x128xf32>
    %cst_4 = arith.constant dense<0xFF800000> : vector<8xf32>
    %6 = vector.multi_reduction <maximumf>, %2, %cst_4 [1] : vector<8x128xf32> to vector<8xf32>
    %7 = vector.shape_cast %6 : vector<8xf32> to vector<8x1xf32>
    %cst_5 = arith.constant dense<0xFF800000> : vector<8xf32>
    %8 = vector.multi_reduction <maximumf>, %5, %cst_5 [1] : vector<8x128xf32> to vector<8xf32>
    %9 = vector.shape_cast %8 : vector<8xf32> to vector<8x1xf32>
    %10 = vector.broadcast %7 : vector<8x1xf32> to vector<8x128xf32>
    %11 = arith.subf %2, %10 : vector<8x128xf32>
    %12 = vector.broadcast %9 : vector<8x1xf32> to vector<8x128xf32>
    %13 = arith.subf %5, %12 : vector<8x128xf32>
    %14 = math.exp %11 : vector<8x128xf32>
    %cst_6 = arith.constant dense<0.000000e+00> : vector<8xf32>
    %15 = vector.multi_reduction <add>, %14, %cst_6 [1] : vector<8x128xf32> to vector<8xf32>
    %16 = vector.shape_cast %15 : vector<8xf32> to vector<8x1xf32>
    %17 = math.log %16 : vector<8x1xf32>
    %18 = math.exp %13 : vector<8x128xf32>
    %cst_7 = arith.constant dense<0.000000e+00> : vector<8xf32>
    %19 = vector.multi_reduction <add>, %18, %cst_7 [1] : vector<8x128xf32> to vector<8xf32>
    %20 = vector.shape_cast %19 : vector<8xf32> to vector<8x1xf32>
    %21 = arith.subf %13, %11 : vector<8x128xf32>
    %22 = arith.mulf %18, %21 : vector<8x128xf32>
    %cst_8 = arith.constant dense<0.000000e+00> : vector<8xf32>
    %23 = vector.multi_reduction <add>, %22, %cst_8 [1] : vector<8x128xf32> to vector<8xf32>
    %24 = vector.shape_cast %23 : vector<8xf32> to vector<8x1xf32>
    %25 = tpu.reciprocal %20 : vector<8x1xf32> -> vector<8x1xf32>
    %26 = arith.mulf %24, %25 : vector<8x1xf32>
    %27 = math.log %20 : vector<8x1xf32>
    %28 = arith.subf %17, %27 : vector<8x1xf32>
    %29 = arith.addf %26, %28 : vector<8x1xf32>
    %c8_i32 = arith.constant 8 : i32
    %30 = arith.muli %arg0, %c8_i32 : i32
    %31 = tpu.iota {dimensions = array<i32: 0>} : vector<8x1xi32>
    %32 = vector.broadcast %30 : i32 to vector<8x1xi32>
    %33 = arith.addi %32, %31 : vector<8x1xi32>
    %c16_i32 = arith.constant 16 : i32
    %34 = vector.broadcast %c16_i32 : i32 to vector<8x1xi32>
    %35 = arith.cmpi slt, %33, %34 : vector<8x1xi32>
    %cst_9 = arith.constant 0.000000e+00 : f32
    %36 = vector.broadcast %cst_9 : f32 to vector<8x1xf32>
    %37 = arith.select %35, %29, %36 : vector<8x1xi1>, vector<8x1xf32>
    %38 = vector.shape_cast %37 : vector<8x1xf32> to vector<1x8x1xf32>
    %cst_10 = arith.constant dense<0.000000e+00> : vector<1xf32>
    %39 = vector.multi_reduction <add>, %38, %cst_10 [1, 2] : vector<1x8x1xf32> to vector<1xf32>
    %40 = vector.shape_cast %39 : vector<1xf32> to vector<1x1x1xf32>
    %41 = vector.extract %40[0, 0, 0] : f32 from vector<1x1x1xf32>
    %42 = vector.broadcast %41 : f32 to vector<1x8x128xf32>
    %c0_11 = arith.constant 0 : index
    %c0_12 = arith.constant 0 : index
    %c0_13 = arith.constant 0 : index
    %43 = vector.load %arg3[%c0_11, %c0_12, %c0_13] : memref<1x8x128xf32, #tpu.memory_space<vmem>>, vector<1x8x128xf32>
    tpu.vector_store %arg3[%c0_11, %c0_12, %c0_13], %42 {strides = array<i32>} : memref<1x8x128xf32, #tpu.memory_space<vmem>>, vector<1x8x128xf32>,
    return
  }
  func.func @transform_0(%arg0: i32) -> (i32, i32) {
    %c0_i32 = arith.constant 0 : i32
    %c0_i32_0 = arith.constant 0 : i32
    return %arg0, %c0_i32 : i32, i32
  }
  func.func @transform_1(%arg0: i32) -> (i32, i32) {
    %c0_i32 = arith.constant 0 : i32
    %c0_i32_0 = arith.constant 0 : i32
    return %arg0, %c0_i32 : i32, i32
  }
  func.func @transform_2(%arg0: i32) -> (i32, i32, i32) {
    %c0_i32 = arith.constant 0 : i32
    %c0_i32_0 = arith.constant 0 : i32
    %c0_i32_1 = arith.constant 0 : i32
    return %arg0, %c0_i32, %c0_i32_0 : i32, i32, i32
  }
}

</mosaic_0001>

<llo_original>
// kernel: tpu_custom_call.1
$region0: #{tpu_custom_call.1}
  #allocation0 [shape = 'u32[]', space=smem, size = 0x4, offset = 0x4, fixed_abs, tag = 'smem constant byte address 0x4 - core index']
  #allocation1 [shape = 'u32[72,128]{1,0:T(1,128)}', space=vmem, size = 0x9000, scoped, tag = 'internal scratch']
  %s0 = inlined_call_operand.hbm [shape: f32[16,128], index: 0, kind: input, shape index: {}]
  %s1 = inlined_call_operand.hbm [shape: f32[16,128], index: 1, kind: input, shape index: {}]
  %s2 = inlined_call_operand.hbm [shape: f32[2,8,128], index: 2, kind: output, shape index: {}]
  %s3 = sld [smem:[#allocation0]]
  $region49: #{tpu_custom_call.1} parent=0
    _
  %s5 = ssub.s32 1, %s3
  %s6 = scalar_select 0, %s5, %s3
  $region1: #{tpu_custom_call.1} parent=0
    #allocation2 [shape = 'u8[8192]{0}', space=vmem, size = 0x2000, scoped, tag = 'input window, operand 0']
    #allocation3 [shape = 's32[2]{0}', space=sflag, size = 0x8, scoped, tag = 'scoped memory for tpu_custom_call.1']
    #allocation4 [shape = 's32[2]{0}', space=sflag, size = 0x8, scoped, tag = 'scoped memory for tpu_custom_call.1']
    #allocation5 [shape = 'u8[8192]{0}', space=vmem, size = 0x2000, scoped, tag = 'input window, operand 1']
    #allocation6 [shape = 's32[2]{0}', space=sflag, size = 0x8, scoped, tag = 'scoped memory for tpu_custom_call.1']
    #allocation7 [shape = 'u8[8192]{0}', space=vmem, size = 0x2000, scoped, tag = 'output window, operand 0']
    %7 = vsyncpa [#allocation3], 0
    %s8 = scalar_lea.sflag [#allocation3], 1
    %9 = vsyncpa %s8, 0
    %10 = vsyncpa [#allocation6], 0
    %s11 = scalar_lea.sflag [#allocation6], 1
    %12 = vsyncpa %s11, 0
    %13 = vsyncpa [#allocation4], 0
    %s14 = scalar_lea.sflag [#allocation4], 1
    %15 = vsyncpa %s14, 0
    loop: start=0, step=1, limit=4
    $region2: #{tpu_custom_call.1} parent=1 // loop_pre_header
      _
    $region3: #{tpu_custom_call.1} parent=1 // loop_header
      %s17 = sphi 0, %s21
      %p18 = scmp.ge.s32.totalorder %s17, 4
      %s27 = sphi 0, %s29
      %s30 = sphi 0, %s27
      %s31 = sphi 0, %s30
      %s47 = sphi 0, %s31
      %s53 = sphi 0, %s55
      %s56 = sphi 0, %s53
      %s57 = sphi 0, %s56
      %s73 = sphi 0, %s57
      %s79 = sphi 0, %s81
      %s82 = sphi 0, %s79
      %s83 = sphi 0, %s82
      %s99 = sphi 0, %s83
    $region4: #{tpu_custom_call.1} parent=1 // loop_header_branch
      %20 = sbr.rel (%p18) target = $region8
    $region5: #{tpu_custom_call.1} parent=1 // loop_body
      %s22 = ssub.s32 %s17, 1
      %s23 = ssub.s32 %s17, 2
      %s24 = sadd.s32 %s17, 1
      %s25 = ssub.s32 %s17, %s24
      %p26 = scmp.eq.s32.totalorder %s25, 0
      %s28 = sadd.s32 %s27, 1
      %s29 = scalar_select %p26, %s27, %s28
      %p32 = pneg %p26
      %p33 = scmp.eq.s32.totalorder %s17, 1
      %p34 = por %p32, %p33
      %p35 = scmp.ne.s32.totalorder %s27, %s30
      %p36 = scmp.eq.s32.totalorder %s17, 0
      %p37 = por %p35, %p36
      %p38 = scmp.ne.s32.totalorder %s27, %s30
      %p39 = scmp.eq.s32.totalorder %s22, 1
      %p40 = por %p38, %p39
      %p41 = scmp.ne.s32.totalorder %s30, %s31
      %p42 = scmp.eq.s32.totalorder %s22, 0
      %p43 = por %p41, %p42
      %p44 = scmp.ne.s32.totalorder %s30, %s31
      %p45 = scmp.eq.s32.totalorder %s23, 1
      %p46 = por %p44, %p45
      %p48 = scmp.ne.s32.totalorder %s31, %s47
      %p49 = scmp.eq.s32.totalorder %s23, 0
      %p50 = por %p48, %p49
      %s51 = ssub.s32 %s17, %s24
      %p52 = scmp.eq.s32.totalorder %s51, 0
      %s54 = sadd.s32 %s53, 1
      %s55 = scalar_select %p52, %s53, %s54
      %p58 = pneg %p52
      %p59 = scmp.eq.s32.totalorder %s17, 1
      %p60 = por %p58, %p59
      %p61 = scmp.ne.s32.totalorder %s53, %s56
      %p62 = scmp.eq.s32.totalorder %s17, 0
      %p63 = por %p61, %p62
      %p64 = scmp.ne.s32.totalorder %s53, %s56
      %p65 = scmp.eq.s32.totalorder %s22, 1
      %p66 = por %p64, %p65
      %p67 = scmp.ne.s32.totalorder %s56, %s57
      %p68 = scmp.eq.s32.totalorder %s22, 0
      %p69 = por %p67, %p68
      %p70 = scmp.ne.s32.totalorder %s56, %s57
      %p71 = scmp.eq.s32.totalorder %s23, 1
      %p72 = por %p70, %p71
      %p74 = scmp.ne.s32.totalorder %s57, %s73
      %p75 = scmp.eq.s32.totalorder %s23, 0
      %p76 = por %p74, %p75
      %s77 = ssub.s32 %s17, %s24
      %p78 = scmp.eq.s32.totalorder %s77, 0
      %s80 = sadd.s32 %s79, 1
      %s81 = scalar_select %p78, %s79, %s80
      %p84 = pneg %p78
      %p85 = scmp.eq.s32.totalorder %s17, 1
      %p86 = por %p84, %p85
      %p87 = scmp.ne.s32.totalorder %s79, %s82
      %p88 = scmp.eq.s32.totalorder %s17, 0
      %p89 = por %p87, %p88
      %p90 = scmp.ne.s32.totalorder %s79, %s82
      %p91 = scmp.eq.s32.totalorder %s22, 1
      %p92 = por %p90, %p91
      %p93 = scmp.ne.s32.totalorder %s82, %s83
      %p94 = scmp.eq.s32.totalorder %s22, 0
      %p95 = por %p93, %p94
      %p96 = scmp.ne.s32.totalorder %s82, %s83
      %p97 = scmp.eq.s32.totalorder %s23, 1
      %p98 = por %p96, %p97
      %p100 = scmp.ne.s32.totalorder %s83, %s99
      %p101 = scmp.eq.s32.totalorder %s23, 0
      %p102 = por %p100, %p101
      %p103 = scmp.le.s32.totalorder 1, %s17
      %p104 = scmp.lt.s32.totalorder %s17, 3
      %p105 = pnand %p103, %p104
      %p106 = pneg %p105
      // Predicated region
      $region9: #{tpu_custom_call.1} parent=5 // pred_check
        _
      $region10: #{tpu_custom_call.1} parent=5 // pred_check_branch
        %108 = sbr.rel (%p105) target = $region12
      $region11: #{tpu_custom_call.1} parent=5 // pred_region
        %s109 = ssub.s32 %s17, 1
      $region12: #{tpu_custom_call.1} parent=5 // pred_fallthru
        _
      %p110 = scmp.lt.s32.totalorder %s17, 2
      // Predicated region
      $region13: #{tpu_custom_call.1} parent=5 // pred_check
        %p111 = pneg %p110
      $region14: #{tpu_custom_call.1} parent=5 // pred_check_branch
        %113 = sbr.rel (%p111) target = $region16
      $region15: #{tpu_custom_call.1} parent=5 // pred_region
        // Predicated region
        $region17: #{tpu_custom_call.1} parent=15 // pred_check
          %p114 = pneg %p37
        $region18: #{tpu_custom_call.1} parent=15 // pred_check_branch
          %116 = sbr.rel (%p114) target = $region20
        $region19: #{tpu_custom_call.1} parent=15 // pred_region
          %s117 = sand.u32 %s27, 1
          %s118 = scalar_lea.sflag [#allocation3], %s117
          %s119 = sand.u32 %s27, 1
          %s120 = smul.addr %s119, 8
          %s121 = scalar_lea.vmem [#allocation2], %s120
          %123 = vsyncadd %s118, 0
          %s124 = smul.addr %s17, 8
          %s125 = scalar_lea.hbm %s0, %s124
          %s127 = sshll.u32 %s125, 4
          %s128 = int_to_ptr.hbm [resolvable:$true] %s127
          %s129 = sshll.u32 %s121, 4
          %s130 = int_to_ptr.vmem [resolvable:$true] %s129
          %132 = dma.hbm_to_vmem [thread:$0]  %s128, 128, %s130, %s118
        $region20: #{tpu_custom_call.1} parent=15 // pred_fallthru
          _
        // Predicated region
        $region21: #{tpu_custom_call.1} parent=15 // pred_check
          %p133 = pneg %p63
        $region22: #{tpu_custom_call.1} parent=15 // pred_check_branch
          %135 = sbr.rel (%p133) target = $region24
        $region23: #{tpu_custom_call.1} parent=15 // pred_region
          %s136 = sand.u32 %s53, 1
          %s137 = scalar_lea.sflag [#allocation6], %s136
          %s138 = sand.u32 %s53, 1
          %s139 = smul.addr %s138, 8
          %s140 = scalar_lea.vmem [#allocation5], %s139
          %142 = vsyncadd %s137, 0
          %s143 = smul.addr %s17, 8
          %s144 = scalar_lea.hbm %s1, %s143
          %s146 = sshll.u32 %s144, 4
          %s147 = int_to_ptr.hbm [resolvable:$true] %s146
          %s148 = sshll.u32 %s140, 4
          %s149 = int_to_ptr.vmem [resolvable:$true] %s148
          %151 = dma.hbm_to_vmem [thread:$0]  %s147, 128, %s149, %s137
        $region24: #{tpu_custom_call.1} parent=15 // pred_fallthru
          _
      $region16: #{tpu_custom_call.1} parent=5 // pred_fallthru
        _
      %p152 = scmp.le.s32.totalorder 1, %s17
      %p153 = scmp.lt.s32.totalorder %s17, 3
      %p154 = pnand %p152, %p153
      %p155 = pneg %p154
      // Predicated region
      $region25: #{tpu_custom_call.1} parent=5 // pred_check
        _
      $region26: #{tpu_custom_call.1} parent=5 // pred_check_branch
        %157 = sbr.rel (%p154) target = $region28
      $region27: #{tpu_custom_call.1} parent=5 // pred_region
        %s158 = ssub.s32 %s17, 1
        %s159 = sand.u32 %s30, 1
        %s160 = scalar_lea.sflag [#allocation3], %s159
        %s161 = sand.u32 %s30, 1
        %s162 = smul.addr %s161, 8
        %s163 = scalar_lea.vmem [#allocation2], %s162
        // Predicated region
        $region29: #{tpu_custom_call.1} parent=27 // pred_check
          %p164 = pneg %p43
        $region30: #{tpu_custom_call.1} parent=27 // pred_check_branch
          %166 = sbr.rel (%p164) target = $region32
        $region31: #{tpu_custom_call.1} parent=27 // pred_region
          %168 = dma.done %s160, 128
        $region32: #{tpu_custom_call.1} parent=27 // pred_fallthru
          _
        %s169 = sand.u32 %s56, 1
        %s170 = scalar_lea.sflag [#allocation6], %s169
        %s171 = sand.u32 %s56, 1
        %s172 = smul.addr %s171, 8
        %s173 = scalar_lea.vmem [#allocation5], %s172
        // Predicated region
        $region33: #{tpu_custom_call.1} parent=27 // pred_check
          %p174 = pneg %p69
        $region34: #{tpu_custom_call.1} parent=27 // pred_check_branch
          %176 = sbr.rel (%p174) target = $region36
        $region35: #{tpu_custom_call.1} parent=27 // pred_region
          %178 = dma.done %s170, 128
        $region36: #{tpu_custom_call.1} parent=27 // pred_fallthru
          _
        %s179 = sand.u32 %s30, 1
        %s180 = scalar_lea.sflag [#allocation3], %s179
        %s181 = sand.u32 %s30, 1
        %s182 = smul.addr %s181, 8
        %s183 = scalar_lea.vmem [#allocation2], %s182
        %p184 = pneg %p43
        %p185 = pneg %p40
        %s186 = sand.u32 %s56, 1
        %s187 = scalar_lea.sflag [#allocation6], %s186
        %s188 = sand.u32 %s56, 1
        %s189 = smul.addr %s188, 8
        %s190 = scalar_lea.vmem [#allocation5], %s189
        %p191 = pneg %p69
        %p192 = pneg %p66
        %p193 = pneg %p95
        %p194 = pneg %p92
        %s195 = sand.u32 %s82, 1
        %s196 = scalar_lea.sflag [#allocation4], %s195
        %s197 = sand.u32 %s82, 1
        %s198 = smul.addr %s197, 8
        %s199 = scalar_lea.vmem [#allocation7], %s198
        %v200 = vld [vmem:[%s163] sm:$0xff]
        %v201 = vmul.f32 %v200, 0.5
        %v202 = vld [vmem:[%s173] sm:$0xff]
        %v203 = vmul.f32 %v202, 0.5
        %204 = vmax.xlane.f32.xlu0 %v201
        %v205 = vpop.xlane.xlu0 %204
        %206 = vmax.xlane.f32.xlu0 %v203
        %v207 = vpop.xlane.xlu0 %206
        %v208 = vsub.f32 %v201, %v205
        %v209 = vsub.f32 %v203, %v207
        %v210 = vmul.f32 %v208, 1.442695
        %v211 = vpow.pop %v210
        %212 = vadd.xlane.f32.xlu0 %v211
        %v213 = vpop.xlane.xlu0 %212
        %v214 = vlog2.pop %v213
        %v215 = vmul.f32 %v214, 0.6931472
        %v216 = vmul.f32 %v209, 1.442695
        %v217 = vpow.pop %v216
        %218 = vadd.xlane.f32.xlu0 %v217
        %v219 = vpop.xlane.xlu0 %218
        %v220 = vsub.f32 %v209, %v208
        %v221 = vmul.f32 %v217, %v220
        %222 = vadd.xlane.f32.xlu0 %v221
        %v223 = vpop.xlane.xlu0 %222
        %v224 = vrcp.pop %v219
        %v225 = vmul.f32 %v219, %v224
        %v226 = vsub.f32 1.0, %v225
        %v227 = vmul.f32 %v224, %v226
        %v228 = vadd.f32 %v224, %v227
        %vm229 = vweird.f32 %v219
        %vm230 = vweird.f32 %v224
        %vm231 = vmor %vm229, %vm230
        %v232 = vsel %vm231, %v224, %v228
        %v233 = vand.u32 2147483647, %v219
        %vm234 = vcmp.eq.f32.partialorder %v233, 8.507059e+37
        %v235 = vand.u32 %v219, 2147483648
        %v236 = vor.u32 1.1754944e-38, %v235
        %v237 = vsel %vm234, %v236, %v232
        %v238 = vmul.f32 %v223, %v237
        %v239 = vlog2.pop %v219
        %v240 = vmul.f32 %v239, 0.6931472
        %v241 = vsub.f32 %v215, %v240
        %v242 = vadd.f32 %v238, %v241
        %s243 = smul.u32 %s22, 8
        %v244 = vlaneseq
        %v245 = vshrl.u32 %v244, 7
        %v246 = vstv %s243
        %v247 = vadd.s32 %v246, %v245
        %vm248 = vcmp.lt.s32.totalorder %v247, 16
        %v249 = vsel %vm248, %v242, 0.0
        %vm250 = vcmask 7168
        %v251 = vsel %vm250, %v249, 0.0
        %252 = vadd.xlane.f32.xlu0 %v251
        %v253 = vpop.xlane.xlu0 %252
        %v254 = vrot.slane %v253, 4
        %v255 = vadd.f32 %v253, %v254
        %v256 = vrot.slane %v255, 2
        %v257 = vadd.f32 %v255, %v256
        %v258 = vrot.slane %v257, 1
        %v259 = vadd.f32 %v257, %v258
        %s260 = vtos %v259
        %v261 = vstv %s260
        %262 = vst [vmem:[%s199] sm:$0xff] %v261
        %s263 = sand.u32 %s82, 1
        %s264 = scalar_lea.sflag [#allocation4], %s263
        %s265 = sand.u32 %s82, 1
        %s266 = smul.addr %s265, 8
        %s267 = scalar_lea.vmem [#allocation7], %s266
        // Predicated region
        $region37: #{tpu_custom_call.1} parent=27 // pred_check
          %p268 = pneg %p92
        $region38: #{tpu_custom_call.1} parent=27 // pred_check_branch
          %270 = sbr.rel (%p268) target = $region40
        $region39: #{tpu_custom_call.1} parent=27 // pred_region
          %272 = vsyncadd %s264, 0
          %s273 = smul.addr %s22, 8
          %s274 = scalar_lea.hbm %s2, %s273
          %s276 = sshll.u32 %s267, 4
          %s277 = int_to_ptr.vmem [resolvable:$true] %s276
          %s278 = sshll.u32 %s274, 4
          %s279 = int_to_ptr.hbm [resolvable:$true] %s278
          %281 = dma.vmem_to_hbm [thread:$0]  %s277, 128, %s279, %s264
        $region40: #{tpu_custom_call.1} parent=27 // pred_fallthru
          _
      $region28: #{tpu_custom_call.1} parent=5 // pred_fallthru
        _
      %p282 = scmp.le.s32.totalorder 2, %s17
      // Predicated region
      $region41: #{tpu_custom_call.1} parent=5 // pred_check
        %p283 = pneg %p282
      $region42: #{tpu_custom_call.1} parent=5 // pred_check_branch
        %285 = sbr.rel (%p283) target = $region44
      $region43: #{tpu_custom_call.1} parent=5 // pred_region
        %s286 = ssub.s32 %s17, 2
        // Predicated region
        $region45: #{tpu_custom_call.1} parent=43 // pred_check
          %p287 = pneg %p98
        $region46: #{tpu_custom_call.1} parent=43 // pred_check_branch
          %289 = sbr.rel (%p287) target = $region48
        $region47: #{tpu_custom_call.1} parent=43 // pred_region
          %s290 = sand.u32 %s83, 1
          %s291 = scalar_lea.sflag [#allocation4], %s290
          %s292 = sand.u32 %s83, 1
          %s293 = smul.addr %s292, 8
          %s294 = scalar_lea.vmem [#allocation7], %s293
          %296 = dma.done %s291, 128
        $region48: #{tpu_custom_call.1} parent=43 // pred_fallthru
          _
      $region44: #{tpu_custom_call.1} parent=5 // pred_fallthru
        _
    $region6: #{tpu_custom_call.1} parent=1 // loop_footer
      %s21 = sadd.s32 1, %s17
    $region7: #{tpu_custom_call.1} parent=1 // loop_footer_branch
      %16 = sbr.rel target = $region3
    $region8: #{tpu_custom_call.1} parent=1 // loop_exit
      _
    %297 = vsyncpa [#allocation3], 1
    %s298 = scalar_lea.sflag [#allocation3], 1
    %299 = vsyncpa %s298, 1
    %300 = vsyncpa [#allocation6], 1
    %s301 = scalar_lea.sflag [#allocation6], 1
    %302 = vsyncpa %s301, 1
    %303 = vsyncpa [#allocation4], 1
    %s304 = scalar_lea.sflag [#allocation4], 1
    %305 = vsyncpa %s304, 1

</llo_original>
